<compile_context>
chip_gen: v6e
topology: v6e:2x2x1
jax: 0.10.0
libtpu: 0.0.40
codegen_flags: <defaults>
</compile_context>

<pallas_src>
import math
import functools

import jax
import jax.numpy as jnp
from jax import lax
from jax.experimental import pallas as pl
from jax.experimental.pallas import tpu as pltpu


# ----------------------------------------------------------------------------- helpers


def _rms_norm(u, g, eps=1e-5):
    # u: (N, D) f32, g: (1, D) f32
    var = jnp.mean(u * u, axis=-1, keepdims=True) + eps
    return (u * lax.rsqrt(var)) * g


def _rotary_fullwidth(u, cos_full, sin_signed):
    # u: (N, D) f32; cos_full = [cos, cos]; sin_signed = [sin, -sin]
    # y[:, :d] = u1*cos + u2*sin ; y[:, d:] = -u1*sin + u2*cos
    # TODO(synk): for 128-aligned D a pltpu.roll(u, D//2, axis=-1) (XLU slot) could replace the concat.
    d = u.shape[-1] // 2
    u_sw = jnp.concatenate([u[:, d:], u[:, :d]], axis=-1)
    return u * cos_full + u_sw * sin_signed


def rotary_tables(T, D):
    # matches the Rotary module: freqs in f32, cos/sin rounded to bf16
    inv_freq = 1.0 / (10000.0 ** (jnp.arange(0, D, 2, dtype=jnp.float32) / D))
    t = jnp.arange(T, dtype=jnp.float32)
    freqs = jnp.outer(t, inv_freq)                                       # (T, D//2)
    cos = jnp.cos(freqs).astype(jnp.bfloat16).astype(jnp.float32)
    sin = jnp.sin(freqs).astype(jnp.bfloat16).astype(jnp.float32)
    return cos, sin


# ----------------------------------------------------------------------------- kernels


def qkv_prepass_kernel(x_ref, w_ref, rot_ref, g_ref, q_ref, k_ref, v_ref, *, head_dim):
    """Per (b, h, t-tile): fused (TN,C)x(C,3D) projection + RMSNorm + rotary -> bf16 q/k/v."""
    D = head_dim
    x = x_ref[0]                       # (TN, C)  bf16
    w = w_ref[0]                       # (C, 3D)  bf16, [Wq_h | Wk_h | Wv_h] pre-transposed
    g = g_ref[...]                     # (1, D)   f32 RMSNorm weight
    cos_full = rot_ref[0]              # (TN, D)  f32
    sin_signed = rot_ref[1]            # (TN, D)  f32

    qkv = jnp.dot(x, w, preferred_element_type=jnp.float32)   # (TN, 3D) f32, plain NN matmul
    # TODO(synk): for D not a multiple of 128 these lane slices cost a per-tile copy; a
    #             128-aligned column-group layout would remove it (pre-pass only, so cheap).
    q = _rotary_fullwidth(_rms_norm(qkv[:, :D], g), cos_full, sin_signed)
    k = _rotary_fullwidth(_rms_norm(qkv[:, D:2 * D], g), cos_full, sin_signed)
    v = qkv[:, 2 * D:]

    q_ref[0, 0] = q.astype(q_ref.dtype)
    k_ref[0, 0] = k.astype(k_ref.dtype)
    v_ref[0, 0] = v.astype(v_ref.dtype)


def flash_kernel(q_ref, k_ref, v_ref, o_ref, m_s, l_s, acc_s, *, scale, bf16_softmax_exp):
    """Per (b, h, qi): online-softmax flash attention over key tiles (ki axis is the carry)."""
    ki = pl.program_id(3)
    n_k = pl.num_programs(3)

    @pl.when(ki == 0)
    def _():
        m_s[...] = jnp.full_like(m_s, -jnp.inf)
        l_s[...] = jnp.zeros_like(l_s)
        acc_s[...] = jnp.zeros_like(acc_s)

    q = q_ref[0, 0]                    # (TQ, D) bf16
    k = k_ref[0, 0]                    # (TK, D) bf16
    v = v_ref[0, 0]                    # (TK, D) bf16

    # scores; the PyTorch attn_mask=ones((T,T)) is a constant bias -> dropped (softmax-invariant)
    s = lax.dot_general(q, k, (((1,), (1,)), ((), ())),
                        preferred_element_type=jnp.float32) * scale      # (TQ, TK) f32

    m_prev = m_s[...]
    m_new = jnp.maximum(m_prev, jnp.max(s, axis=-1, keepdims=True))
    alpha = jnp.exp(m_prev - m_new)                                      # (TQ, 1) f32 (cheap)
    if bf16_softmax_exp:
        # bf16 EUP exponentials (v6e/v7x); p is already bf16 for the PV matmul.
        p = jnp.exp((s - m_new).astype(jnp.bfloat16))
    else:
        p = jnp.exp(s - m_new).astype(jnp.bfloat16)                      # f32 exp path (v5e)
    l_s[...] = alpha * l_s[...] + jnp.sum(p.astype(jnp.float32), axis=-1, keepdims=True)
    acc_s[...] = alpha * acc_s[...] + jnp.dot(p, v, preferred_element_type=jnp.float32)
    m_s[...] = m_new

    @pl.when(ki == n_k - 1)
    def _():
        inv_l = pl.reciprocal(l_s[...], approx=True)
        o_ref[0, 0] = (acc_s[...] * inv_l).astype(o_ref.dtype)           # bf16 per-head output


# ----------------------------------------------------------------------------- wrapper


def causal_self_attention_pallas(x, wq, wk, wv, wproj, rms_weight, n_head,
                                 *, seq_tile=256, q_tile=256, kv_tile=256,
                                 bf16_softmax_exp=True):
    B, T, C = x.shape
    assert C % n_head == 0
    H = n_head
    D = C // H
    TN = min(T, seq_tile)
    TQ = min(T, q_tile)
    TK = min(T, kv_tile)
    # TODO(synk): ragged T would need masking of the padded tiles; not required here.
    assert T % TN == 0 and T % TQ == 0 and T % TK == 0, "T must be divisible by the chosen tiles"

    # sign-folded full-width rotary tables, packed into one lane-dense (2, T, D) array
    cos, sin = rotary_tables(T, D)
    rot = jnp.stack([jnp.concatenate([cos, cos], axis=-1),
                     jnp.concatenate([sin, -sin], axis=-1)], axis=0)     # (2, T, D) f32

    # bf16 MXU operands; all accumulation happens in f32 in-kernel.
    xb = x.astype(jnp.bfloat16)
    # Pre-transpose per-head weights to (H, C, D) so the in-kernel GEMM is a plain NN matmul,
    # and pack [Wq_h | Wk_h | Wv_h] along the output axis -> one fused (C, 3D) matmul per step.
    wq_h = jnp.swapaxes(wq.reshape(H, D, C), 1, 2)
    wk_h = jnp.swapaxes(wk.reshape(H, D, C), 1, 2)
    wv_h = jnp.swapaxes(wv.reshape(H, D, C), 1, 2)
    w_packed = jnp.concatenate([wq_h, wk_h, wv_h], axis=-1).astype(jnp.bfloat16)   # (H, C, 3D)
    g = rms_weight.reshape(1, D).astype(jnp.float32)

    # -------- pre-pass: q/k/v projection + RMSNorm + rotary, emitted bf16 as (B, H, T, D)
    qkv_kernel = functools.partial(qkv_prepass_kernel, head_dim=D)
    qkv_shape = jax.ShapeDtypeStruct((B, H, T, D), jnp.bfloat16)
    q_hbm, k_hbm, v_hbm = pl.pallas_call(
        qkv_kernel,
        out_shape=(qkv_shape, qkv_shape, qkv_shape),
        grid_spec=pltpu.PrefetchScalarGridSpec(
            num_scalar_prefetch=0,
            grid=(B, H, T // TN),                                         # weights resident per (b,h)
            in_specs=[
                pl.BlockSpec((1, TN, C), lambda b, h, ti: (b, ti, 0)),    # x rows
                pl.BlockSpec((1, C, 3 * D), lambda b, h, ti: (h, 0, 0)),  # packed per-head weights
                pl.BlockSpec((2, TN, D), lambda b, h, ti: (0, ti, 0)),    # rotary tables
                pl.BlockSpec((1, D), lambda b, h, ti: (0, 0)),            # RMSNorm weight
            ],
            out_specs=[
                pl.BlockSpec((1, 1, TN, D), lambda b, h, ti: (b, h, ti, 0)),
                pl.BlockSpec((1, 1, TN, D), lambda b, h, ti: (b, h, ti, 0)),
                pl.BlockSpec((1, 1, TN, D), lambda b, h, ti: (b, h, ti, 0)),
            ],
        ),
        compiler_params=pltpu.CompilerParams(
            dimension_semantics=("parallel", "parallel", "parallel"),
            vmem_limit_bytes=48 * 1024 * 1024,
        ),
    )(xb, w_packed, rot, g)

    # -------- flash attention: per-head online softmax, streams (TK, D) K/V tiles
    scale = 1.0 / math.sqrt(D)
    fkernel = functools.partial(flash_kernel, scale=scale, bf16_softmax_exp=bf16_softmax_exp)
    y = pl.pallas_call(
        fkernel,
        out_shape=jax.ShapeDtypeStruct((B, H, T, D), jnp.bfloat16),
        grid_spec=pltpu.PrefetchScalarGridSpec(
            num_scalar_prefetch=0,
            grid=(B, H, T // TQ, T // TK),
            in_specs=[
                pl.BlockSpec((1, 1, TQ, D), lambda b, h, qi, ki: (b, h, qi, 0)),
                pl.BlockSpec((1, 1, TK, D), lambda b, h, qi, ki: (b, h, ki, 0)),
                pl.BlockSpec((1, 1, TK, D), lambda b, h, qi, ki: (b, h, ki, 0)),
            ],
            out_specs=pl.BlockSpec((1, 1, TQ, D), lambda b, h, qi, ki: (b, h, qi, 0)),
            scratch_shapes=[
                pltpu.VMEM((TQ, 1), jnp.float32),   # m (running max)
                pltpu.VMEM((TQ, 1), jnp.float32),   # l (running denom)
                pltpu.VMEM((TQ, D), jnp.float32),   # attention accumulator
            ],
        ),
        compiler_params=pltpu.CompilerParams(
            # b/h/qi independent -> both v7x TensorCores get balanced work; ki carries the softmax state.
            dimension_semantics=("parallel", "parallel", "parallel", "arbitrary"),
            vmem_limit_bytes=48 * 1024 * 1024,
        ),
    )(q_hbm, k_hbm, v_hbm)

    # -------- c_proj hoisted out of the loop: one full-width XLA GEMM, weights read once.
    wp = wproj.reshape(C, H, D).astype(jnp.bfloat16)                      # (C_out, H, D)
    out = jnp.einsum("bhtd,chd->btc", y, wp, preferred_element_type=jnp.float32)
    return out


# ----------------------------------------------------------------------------- reference & test


def causal_self_attention_ref(x, wq, wk, wv, wproj, rms_weight, n_head):
    """Pure-JAX f32 reference mirroring the PyTorch forward exactly."""
    B, T, C = x.shape
    D = C // n_head
    q = (x @ wq.T).reshape(B, T, n_head, D)
    k = (x @ wk.T).reshape(B, T, n_head, D)
    v = (x @ wv.T).reshape(B, T, n_head, D)

    cos, sin = rotary_tables(T, D)
    cos = cos[None, :, None, :]
    sin = sin[None, :, None, :]

    def rms(u):
        var = jnp.mean(u * u, axis=-1, keepdims=True) + 1e-5
        return rms_weight * (u * lax.rsqrt(var))

    def rot(u):
        d = D // 2
        u1, u2 = u[..., :d], u[..., d:]
        return jnp.concatenate([u1 * cos + u2 * sin, -u1 * sin + u2 * cos], axis=-1)

    q, k = rot(rms(q)), rot(rms(k))
    qh = q.transpose(0, 2, 1, 3)
    kh = k.transpose(0, 2, 1, 3)
    vh = v.transpose(0, 2, 1, 3)
    s = jnp.einsum("bhqd,bhkd->bhqk", qh, kh) / math.sqrt(D) + 1.0   # ones attn_mask
    a = jax.nn.softmax(s, axis=-1)
    y = jnp.einsum("bhqk,bhkd->bhqd", a, vh)
    y = y.transpose(0, 2, 1, 3).reshape(B, T, C)
    return y @ wproj.T


if __name__ == "__main__":
    B, T, n_head, D = 2, 8, 4, 8
    C = n_head * D

    key = jax.random.PRNGKey(0)
    kx, kq, kk, kv, kp = jax.random.split(key, 5)
    x = jax.random.normal(kx, (B, T, C), dtype=jnp.float32)
    wq = jax.random.normal(kq, (C, C), dtype=jnp.float32) * 0.05
    wk = jax.random.normal(kk, (C, C), dtype=jnp.float32) * 0.05
    wv = jax.random.normal(kv, (C, C), dtype=jnp.float32) * 0.05
    # NOTE: the original module zero-inits c_proj; we use a random deterministic init so the
    # test is non-trivial (forward semantics are identical either way).
    wproj = jax.random.normal(kp, (C, C), dtype=jnp.float32) * 0.05
    rms_weight = jnp.ones((D,), dtype=jnp.float32)

    out = causal_self_attention_pallas(x, wq, wk, wv, wproj, rms_weight, n_head)
    out = jax.block_until_ready(out)

    ref = causal_self_attention_ref(x, wq, wk, wv, wproj, rms_weight, n_head)
    assert out.shape == (B, T, C)
    # bf16 MXU operands + bf16 exps + approx reciprocal -> looser tolerance than pure f32
    assert jnp.allclose(out, ref, rtol=2e-2, atol=2e-2), "mismatch vs JAX reference"

    print("KERNEL_OK")
</pallas_src>

<mosaic_0001>
module attributes {stable_mosaic.version = 11 : i64} {
  func.func @qkv_prepass_kernel(%arg0: i32, %arg1: i32, %arg2: i32, %arg3: memref<1x8x32xbf16, #tpu.memory_space<vmem>>, %arg4: memref<1x32x24xbf16, #tpu.memory_space<vmem>>, %arg5: memref<2x8x8xf32, #tpu.memory_space<vmem>>, %arg6: memref<1x8xf32, #tpu.memory_space<vmem>>, %arg7: memref<1x1x8x8xbf16, #tpu.memory_space<vmem>>, %arg8: memref<1x1x8x8xbf16, #tpu.memory_space<vmem>>, %arg9: memref<1x1x8x8xbf16, #tpu.memory_space<vmem>>) attributes {dimension_semantics = [#tpu.dimension_semantics<parallel>, #tpu.dimension_semantics<parallel>, #tpu.dimension_semantics<parallel>], iteration_bounds = array<i64: 2, 4, 1>, scalar_prefetch = 0 : i64, scratch_operands = 0 : i64, tpu.core_type = #tpu.core_type<tc>, window_params = [{transform_indices = @transform_0, window_bounds = array<i64: 1, 8, 32>}, {transform_indices = @transform_1, window_bounds = array<i64: 1, 32, 24>}, {transform_indices = @transform_2, window_bounds = array<i64: 2, 8, 8>}, {pipeline_mode = #tpu.pipeline_mode<synchronous>, transform_indices = @transform_3, window_bounds = array<i64: 1, 8>}, {transform_indices = @transform_4, window_bounds = array<i64: 1, 1, 8, 8>}, {transform_indices = @transform_5, window_bounds = array<i64: 1, 1, 8, 8>}, {transform_indices = @transform_6, window_bounds = array<i64: 1, 1, 8, 8>}]} {
    %c0 = arith.constant 0 : index
    %c0_0 = arith.constant 0 : index
    %c0_1 = arith.constant 0 : index
    %0 = vector.load %arg3[%c0, %c0_0, %c0_1] : memref<1x8x32xbf16, #tpu.memory_space<vmem>>, vector<1x8x32xbf16>
    %1 = vector.shape_cast %0 : vector<1x8x32xbf16> to vector<8x32xbf16>
    %c0_2 = arith.constant 0 : index
    %c0_3 = arith.constant 0 : index
    %c0_4 = arith.constant 0 : index
    %2 = vector.load %arg4[%c0_2, %c0_3, %c0_4] : memref<1x32x24xbf16, #tpu.memory_space<vmem>>, vector<1x32x24xbf16>
    %3 = vector.shape_cast %2 : vector<1x32x24xbf16> to vector<32x24xbf16>
    %c0_5 = arith.constant 0 : index
    %c0_6 = arith.constant 0 : index
    %4 = vector.load %arg6[%c0_5, %c0_6] : memref<1x8xf32, #tpu.memory_space<vmem>>, vector<1x8xf32>
    %c0_7 = arith.constant 0 : index
    %c0_8 = arith.constant 0 : index
    %c0_9 = arith.constant 0 : index
    %5 = vector.load %arg5[%c0_7, %c0_8, %c0_9] : memref<2x8x8xf32, #tpu.memory_space<vmem>>, vector<1x8x8xf32>
    %6 = vector.shape_cast %5 : vector<1x8x8xf32> to vector<8x8xf32>
    %c1 = arith.constant 1 : index
    %c0_10 = arith.constant 0 : index
    %c0_11 = arith.constant 0 : index
    %7 = vector.load %arg5[%c1, %c0_10, %c0_11] : memref<2x8x8xf32, #tpu.memory_space<vmem>>, vector<1x8x8xf32>
    %8 = vector.shape_cast %7 : vector<1x8x8xf32> to vector<8x8xf32>
    %cst = arith.constant dense<0.000000e+00> : vector<8x24xf32>
    %9 = tpu.matmul %1, %3, %cst {dimension_numbers = #tpu.dot_dimension_numbers<[1], [0], [0], [1], [0, 0, 1, 1], [], []>} : vector<8x32xbf16>, vector<32x24xbf16>, vector<8x24xf32> -> vector<8x24xf32>
    %10 = vector.extract_strided_slice %9 {offsets = [0, 0], sizes = [8, 8], strides = [1, 1]} : vector<8x24xf32> to vector<8x8xf32>
    %11 = arith.mulf %10, %10 : vector<8x8xf32>
    %cst_12 = arith.constant dense<0.000000e+00> : vector<8xf32>
    %12 = vector.multi_reduction <add>, %11, %cst_12 [1] : vector<8x8xf32> to vector<8xf32>
    %13 = vector.shape_cast %12 : vector<8xf32> to vector<8x1xf32>
    %cst_13 = arith.constant 8.000000e+00 : f32
    %14 = vector.broadcast %cst_13 : f32 to vector<8x1xf32>
    %15 = arith.divf %13, %14 : vector<8x1xf32>
    %cst_14 = arith.constant 9.99999974E-6 : f32
    %16 = vector.broadcast %cst_14 : f32 to vector<8x1xf32>
    %17 = arith.addf %15, %16 : vector<8x1xf32>
    %18 = math.rsqrt %17 : vector<8x1xf32>
    %19 = vector.broadcast %18 : vector<8x1xf32> to vector<8x8xf32>
    %20 = arith.mulf %10, %19 : vector<8x8xf32>
    %21 = vector.broadcast %4 : vector<1x8xf32> to vector<8x8xf32>
    %22 = arith.mulf %20, %21 : vector<8x8xf32>
    %23 = vector.extract_strided_slice %22 {offsets = [0, 4], sizes = [8, 4], strides = [1, 1]} : vector<8x8xf32> to vector<8x4xf32>
    %24 = vector.extract_strided_slice %22 {offsets = [0, 0], sizes = [8, 4], strides = [1, 1]} : vector<8x8xf32> to vector<8x4xf32>
    %25 = tpu.concatenate %23, %24 in 1 : vector<8x4xf32>, vector<8x4xf32> -> vector<8x8xf32>
    %26 = arith.mulf %22, %6 : vector<8x8xf32>
    %27 = arith.mulf %25, %8 : vector<8x8xf32>
    %28 = arith.addf %26, %27 : vector<8x8xf32>
    %29 = vector.extract_strided_slice %9 {offsets = [0, 8], sizes = [8, 8], strides = [1, 1]} : vector<8x24xf32> to vector<8x8xf32>
    %30 = arith.mulf %29, %29 : vector<8x8xf32>
    %cst_15 = arith.constant dense<0.000000e+00> : vector<8xf32>
    %31 = vector.multi_reduction <add>, %30, %cst_15 [1] : vector<8x8xf32> to vector<8xf32>
    %32 = vector.shape_cast %31 : vector<8xf32> to vector<8x1xf32>
    %cst_16 = arith.constant 8.000000e+00 : f32
    %33 = vector.broadcast %cst_16 : f32 to vector<8x1xf32>
    %34 = arith.divf %32, %33 : vector<8x1xf32>
    %cst_17 = arith.constant 9.99999974E-6 : f32
    %35 = vector.broadcast %cst_17 : f32 to vector<8x1xf32>
    %36 = arith.addf %34, %35 : vector<8x1xf32>
    %37 = math.rsqrt %36 : vector<8x1xf32>
    %38 = vector.broadcast %37 : vector<8x1xf32> to vector<8x8xf32>
    %39 = arith.mulf %29, %38 : vector<8x8xf32>
    %40 = vector.broadcast %4 : vector<1x8xf32> to vector<8x8xf32>
    %41 = arith.mulf %39, %40 : vector<8x8xf32>
    %42 = vector.extract_strided_slice %41 {offsets = [0, 4], sizes = [8, 4], strides = [1, 1]} : vector<8x8xf32> to vector<8x4xf32>
    %43 = vector.extract_strided_slice %41 {offsets = [0, 0], sizes = [8, 4], strides = [1, 1]} : vector<8x8xf32> to vector<8x4xf32>
    %44 = tpu.concatenate %42, %43 in 1 : vector<8x4xf32>, vector<8x4xf32> -> vector<8x8xf32>
    %45 = arith.mulf %41, %6 : vector<8x8xf32>
    %46 = arith.mulf %44, %8 : vector<8x8xf32>
    %47 = arith.addf %45, %46 : vector<8x8xf32>
    %48 = vector.extract_strided_slice %9 {offsets = [0, 16], sizes = [8, 8], strides = [1, 1]} : vector<8x24xf32> to vector<8x8xf32>
    %49 = arith.truncf %28 : vector<8x8xf32> to vector<8x8xbf16>
    %c0_18 = arith.constant 0 : index
    %c0_19 = arith.constant 0 : index
    %c0_20 = arith.constant 0 : index
    %c0_21 = arith.constant 0 : index
    %50 = vector.load %arg7[%c0_18, %c0_19, %c0_20, %c0_21] : memref<1x1x8x8xbf16, #tpu.memory_space<vmem>>, vector<1x1x8x8xbf16>
    %51 = vector.shape_cast %50 : vector<1x1x8x8xbf16> to vector<8x8xbf16>
    %52 = vector.shape_cast %49 : vector<8x8xbf16> to vector<1x1x8x8xbf16>
    tpu.vector_store %arg7[%c0_18, %c0_19, %c0_20, %c0_21], %52 {strides = array<i32>} : memref<1x1x8x8xbf16, #tpu.memory_space<vmem>>, vector<1x1x8x8xbf16>,
    %53 = arith.truncf %47 : vector<8x8xf32> to vector<8x8xbf16>
    %c0_22 = arith.constant 0 : index
    %c0_23 = arith.constant 0 : index
    %c0_24 = arith.constant 0 : index
    %c0_25 = arith.constant 0 : index
    %54 = vector.load %arg8[%c0_22, %c0_23, %c0_24, %c0_25] : memref<1x1x8x8xbf16, #tpu.memory_space<vmem>>, vector<1x1x8x8xbf16>
    %55 = vector.shape_cast %54 : vector<1x1x8x8xbf16> to vector<8x8xbf16>
    %56 = vector.shape_cast %53 : vector<8x8xbf16> to vector<1x1x8x8xbf16>
    tpu.vector_store %arg8[%c0_22, %c0_23, %c0_24, %c0_25], %56 {strides = array<i32>} : memref<1x1x8x8xbf16, #tpu.memory_space<vmem>>, vector<1x1x8x8xbf16>,
    %57 = arith.truncf %48 : vector<8x8xf32> to vector<8x8xbf16>
    %c0_26 = arith.constant 0 : index
    %c0_27 = arith.constant 0 : index
    %c0_28 = arith.constant 0 : index
    %c0_29 = arith.constant 0 : index
    %58 = vector.load %arg9[%c0_26, %c0_27, %c0_28, %c0_29] : memref<1x1x8x8xbf16, #tpu.memory_space<vmem>>, vector<1x1x8x8xbf16>
    %59 = vector.shape_cast %58 : vector<1x1x8x8xbf16> to vector<8x8xbf16>
    %60 = vector.shape_cast %57 : vector<8x8xbf16> to vector<1x1x8x8xbf16>
    tpu.vector_store %arg9[%c0_26, %c0_27, %c0_28, %c0_29], %60 {strides = array<i32>} : memref<1x1x8x8xbf16, #tpu.memory_space<vmem>>, vector<1x1x8x8xbf16>,
    return
  }
  func.func @transform_0(%arg0: i32, %arg1: i32, %arg2: i32) -> (i32, i32, i32) {
    %c0_i32 = arith.constant 0 : i32
    %c0_i32_0 = arith.constant 0 : i32
    return %arg0, %arg2, %c0_i32 : i32, i32, i32
  }
  func.func @transform_1(%arg0: i32, %arg1: i32, %arg2: i32) -> (i32, i32, i32) {
    %c0_i32 = arith.constant 0 : i32
    %c0_i32_0 = arith.constant 0 : i32
    %c0_i32_1 = arith.constant 0 : i32
    return %arg1, %c0_i32, %c0_i32_0 : i32, i32, i32
  }
  func.func @transform_2(%arg0: i32, %arg1: i32, %arg2: i32) -> (i32, i32, i32) {
    %c0_i32 = arith.constant 0 : i32
    %c0_i32_0 = arith.constant 0 : i32
    %c0_i32_1 = arith.constant 0 : i32
    return %c0_i32, %arg2, %c0_i32_0 : i32, i32, i32
  }
  func.func @transform_3(%arg0: i32, %arg1: i32, %arg2: i32) -> (i32, i32) {
    %c0_i32 = arith.constant 0 : i32
    %c0_i32_0 = arith.constant 0 : i32
    %c0_i32_1 = arith.constant 0 : i32
    return %c0_i32, %c0_i32_0 : i32, i32
  }
  func.func @transform_4(%arg0: i32, %arg1: i32, %arg2: i32) -> (i32, i32, i32, i32) {
    %c0_i32 = arith.constant 0 : i32
    %c0_i32_0 = arith.constant 0 : i32
    return %arg0, %arg1, %arg2, %c0_i32 : i32, i32, i32, i32
  }
  func.func @transform_5(%arg0: i32, %arg1: i32, %arg2: i32) -> (i32, i32, i32, i32) {
    %c0_i32 = arith.constant 0 : i32
    %c0_i32_0 = arith.constant 0 : i32
    return %arg0, %arg1, %arg2, %c0_i32 : i32, i32, i32, i32
  }
  func.func @transform_6(%arg0: i32, %arg1: i32, %arg2: i32) -> (i32, i32, i32, i32) {
    %c0_i32 = arith.constant 0 : i32
    %c0_i32_0 = arith.constant 0 : i32
    return %arg0, %arg1, %arg2, %c0_i32 : i32, i32, i32, i32
  }
}

</mosaic_0001>

<llo_original>
// kernel: tpu_custom_call.1
$region0: #{tpu_custom_call.1}
  #allocation0 [shape = 'u32[]', space=smem, size = 0x4, offset = 0x4, fixed_abs, tag = 'smem constant byte address 0x4 - core index']
  #allocation1 [shape = 'u32[144,128]{1,0:T(1,128)}', space=vmem, size = 0x12000, scoped, tag = 'internal scratch']
  %s0 = inlined_call_operand.vmem [shape: bf16[2,8,32], index: 0, kind: input, shape index: {}]
  %s1 = inlined_call_operand.vmem [shape: bf16[4,32,24], index: 1, kind: input, shape index: {}]
  %s2 = inlined_call_operand.vmem [shape: f32[2,8,8], index: 2, kind: input, shape index: {}]
  %s3 = inlined_call_operand.vmem [shape: f32[1,8], index: 3, kind: input, shape index: {}]
  %s4 = inlined_call_operand.hbm [shape: bf16[2,4,8,8], index: 4, kind: output, shape index: {0}]
  %s5 = inlined_call_operand.hbm [shape: bf16[2,4,8,8], index: 5, kind: output, shape index: {1}]
  %s6 = inlined_call_operand.hbm [shape: bf16[2,4,8,8], index: 6, kind: output, shape index: {2}]
  %7 = xla_tuple %s4, %s5, %s6
  %s8 = sld [smem:[#allocation0]]
  $region65: #{tpu_custom_call.1} parent=0
    _
  %s10 = ssub.s32 1, %s8
  %s11 = scalar_select 0, %s10, %s8
  $region1: #{tpu_custom_call.1} parent=0
    #allocation2 [shape = 'u8[4096]{0}', space=vmem, size = 0x1000, scoped, tag = 'output window, operand 0']
    #allocation3 [shape = 's32[2]{0}', space=sflag, size = 0x8, scoped, tag = 'scoped memory for tpu_custom_call.1']
    #allocation4 [shape = 'u8[4096]{0}', space=vmem, size = 0x1000, scoped, tag = 'output window, operand 1']
    #allocation5 [shape = 's32[2]{0}', space=sflag, size = 0x8, scoped, tag = 'scoped memory for tpu_custom_call.1']
    #allocation6 [shape = 'u8[4096]{0}', space=vmem, size = 0x1000, scoped, tag = 'output window, operand 2']
    %12 = vsyncpa [#allocation3], 0
    %s13 = scalar_lea.sflag [#allocation3], 1
    %14 = vsyncpa %s13, 0
    %15 = vsyncpa [#allocation5], 0
    %s16 = scalar_lea.sflag [#allocation5], 1
    %17 = vsyncpa %s16, 0
    loop: start=0, step=1, limit=10
    $region2: #{tpu_custom_call.1} parent=1 // loop_pre_header
      _
    $region3: #{tpu_custom_call.1} parent=1 // loop_header
      %s19 = sphi 0, %s23
      %p20 = scmp.ge.s32.totalorder %s19, 10
      %s26 = sphi 0, %s45
      %s27 = sphi 0, %s41
      %s28 = sphi 0, %s37
      %s29 = sphi 0, %s26
      %s30 = sphi 0, %s27
      %s31 = sphi 0, %s28
      %s32 = sphi 0, %s29
      %s33 = sphi 0, %s30
      %s34 = sphi 0, %s31
      %s50 = sphi 0, %s52
      %s53 = sphi 0, %s50
      %s54 = sphi 0, %s53
      %s70 = sphi 0, %s54
      %s76 = sphi 0, %s78
      %s79 = sphi 0, %s76
      %s80 = sphi 0, %s79
      %s96 = sphi 0, %s80
      %s102 = sphi 0, %s104
      %s105 = sphi 0, %s102
      %s106 = sphi 0, %s105
      %s122 = sphi 0, %s106
      %s126 = sphi 0, %s126
      %s128 = sphi 0, %s126
      %s129 = sphi 0, %s128
      %s143 = sphi 0, %s129
      %s153 = sphi 0, %s155
      %s156 = sphi 0, %s153
      %s157 = sphi 0, %s156
      %s173 = sphi 0, %s157
      %s183 = sphi 0, %s185
      %s186 = sphi 0, %s183
      %s187 = sphi 0, %s186
      %s203 = sphi 0, %s187
      %s213 = sphi 0, %s215
      %s216 = sphi 0, %s213
      %s217 = sphi 0, %s216
      %s233 = sphi 0, %s217
    $region4: #{tpu_custom_call.1} parent=1 // loop_header_branch
      %22 = sbr.rel (%p20) target = $region8
    $region5: #{tpu_custom_call.1} parent=1 // loop_body
      %s24 = ssub.s32 %s19, 1
      %s25 = ssub.s32 %s19, 2
      %s35 = sadd.s32 1, %s28
      %p36 = scmp.ge.s32.totalorder %s35, 1
      %s37 = scalar_select %p36, 0, %s35
      %s38 = sadd.s32 1, %s27
      %s39 = scalar_select %p36, %s38, %s27
      %p40 = scmp.ge.s32.totalorder %s39, 4
      %s41 = scalar_select %p40, 0, %s39
      %s42 = sadd.s32 1, %s26
      %s43 = scalar_select %p40, %s42, %s26
      %p44 = scmp.ge.s32.totalorder %s43, 2
      %s45 = scalar_select %p44, 0, %s43
      %s46 = ssub.s32 %s26, %s45
      %s47 = ssub.s32 %s28, %s37
      %s48 = sor.u32 %s46, %s47
      %p49 = scmp.eq.s32.totalorder %s48, 0
      %s51 = sadd.s32 %s50, 1
      %s52 = scalar_select %p49, %s50, %s51
      %p55 = pneg %p49
      %p56 = scmp.eq.s32.totalorder %s19, 7
      %p57 = por %p55, %p56
      %p58 = scmp.ne.s32.totalorder %s50, %s53
      %p59 = scmp.eq.s32.totalorder %s19, 0
      %p60 = por %p58, %p59
      %p61 = scmp.ne.s32.totalorder %s50, %s53
      %p62 = scmp.eq.s32.totalorder %s24, 7
      %p63 = por %p61, %p62
      %p64 = scmp.ne.s32.totalorder %s53, %s54
      %p65 = scmp.eq.s32.totalorder %s24, 0
      %p66 = por %p64, %p65
      %p67 = scmp.ne.s32.totalorder %s53, %s54
      %p68 = scmp.eq.s32.totalorder %s25, 7
      %p69 = por %p67, %p68
      %p71 = scmp.ne.s32.totalorder %s54, %s70
      %p72 = scmp.eq.s32.totalorder %s25, 0
      %p73 = por %p71, %p72
      %s74 = ssub.s32 %s27, %s41
      %p75 = scmp.eq.s32.totalorder %s74, 0
      %s77 = sadd.s32 %s76, 1
      %s78 = scalar_select %p75, %s76, %s77
      %p81 = pneg %p75
      %p82 = scmp.eq.s32.totalorder %s19, 7
      %p83 = por %p81, %p82
      %p84 = scmp.ne.s32.totalorder %s76, %s79
      %p85 = scmp.eq.s32.totalorder %s19, 0
      %p86 = por %p84, %p85
      %p87 = scmp.ne.s32.totalorder %s76, %s79
      %p88 = scmp.eq.s32.totalorder %s24, 7
      %p89 = por %p87, %p88
      %p90 = scmp.ne.s32.totalorder %s79, %s80
      %p91 = scmp.eq.s32.totalorder %s24, 0
      %p92 = por %p90, %p91
      %p93 = scmp.ne.s32.totalorder %s79, %s80
      %p94 = scmp.eq.s32.totalorder %s25, 7
      %p95 = por %p93, %p94
      %p97 = scmp.ne.s32.totalorder %s80, %s96
      %p98 = scmp.eq.s32.totalorder %s25, 0
      %p99 = por %p97, %p98
      %s100 = ssub.s32 %s28, %s37
      %p101 = scmp.eq.s32.totalorder %s100, 0
      %s103 = sadd.s32 %s102, 1
      %s104 = scalar_select %p101, %s102, %s103
      %p107 = pneg %p101
      %p108 = scmp.eq.s32.totalorder %s19, 7
      %p109 = por %p107, %p108
      %p110 = scmp.ne.s32.totalorder %s102, %s105
      %p111 = scmp.eq.s32.totalorder %s19, 0
      %p112 = por %p110, %p111
      %p113 = scmp.ne.s32.totalorder %s102, %s105
      %p114 = scmp.eq.s32.totalorder %s24, 7
      %p115 = por %p113, %p114
      %p116 = scmp.ne.s32.totalorder %s105, %s106
      %p117 = scmp.eq.s32.totalorder %s24, 0
      %p118 = por %p116, %p117
      %p119 = scmp.ne.s32.totalorder %s105, %s106
      %p120 = scmp.eq.s32.totalorder %s25, 7
      %p121 = por %p119, %p120
      %p123 = scmp.ne.s32.totalorder %s106, %s122
      %p124 = scmp.eq.s32.totalorder %s25, 0
      %p125 = por %p123, %p124
      %s127 = sadd.s32 %s126, 1
      %p130 = scmp.eq.s32.totalorder %s19, 7
      %p131 = scmp.ne.s32.totalorder %s126, %s128
      %p132 = scmp.eq.s32.totalorder %s19, 0
      %p133 = por %p131, %p132
      %p134 = scmp.ne.s32.totalorder %s126, %s128
      %p135 = scmp.eq.s32.totalorder %s24, 7
      %p136 = por %p134, %p135
      %p137 = scmp.ne.s32.totalorder %s128, %s129
      %p138 = scmp.eq.s32.totalorder %s24, 0
      %p139 = por %p137, %p138
      %p140 = scmp.ne.s32.totalorder %s128, %s129
      %p141 = scmp.eq.s32.totalorder %s25, 7
      %p142 = por %p140, %p141
      %p144 = scmp.ne.s32.totalorder %s129, %s143
      %p145 = scmp.eq.s32.totalorder %s25, 0
      %p146 = por %p144, %p145
      %s147 = ssub.s32 %s26, %s45
      %s148 = ssub.s32 %s27, %s41
      %s149 = sor.u32 %s147, %s148
      %s150 = ssub.s32 %s28, %s37
      %s151 = sor.u32 %s149, %s150
      %p152 = scmp.eq.s32.totalorder %s151, 0
      %s154 = sadd.s32 %s153, 1
      %s155 = scalar_select %p152, %s153, %s154
      %p158 = pneg %p152
      %p159 = scmp.eq.s32.totalorder %s19, 7
      %p160 = por %p158, %p159
      %p161 = scmp.ne.s32.totalorder %s153, %s156
      %p162 = scmp.eq.s32.totalorder %s19, 0
      %p163 = por %p161, %p162
      %p164 = scmp.ne.s32.totalorder %s153, %s156
      %p165 = scmp.eq.s32.totalorder %s24, 7
      %p166 = por %p164, %p165
      %p167 = scmp.ne.s32.totalorder %s156, %s157
      %p168 = scmp.eq.s32.totalorder %s24, 0
      %p169 = por %p167, %p168
      %p170 = scmp.ne.s32.totalorder %s156, %s157
      %p171 = scmp.eq.s32.totalorder %s25, 7
      %p172 = por %p170, %p171
      %p174 = scmp.ne.s32.totalorder %s157, %s173
      %p175 = scmp.eq.s32.totalorder %s25, 0
      %p176 = por %p174, %p175
      %s177 = ssub.s32 %s26, %s45
      %s178 = ssub.s32 %s27, %s41
      %s179 = sor.u32 %s177, %s178
      %s180 = ssub.s32 %s28, %s37
      %s181 = sor.u32 %s179, %s180
      %p182 = scmp.eq.s32.totalorder %s181, 0
      %s184 = sadd.s32 %s183, 1
      %s185 = scalar_select %p182, %s183, %s184
      %p188 = pneg %p182
      %p189 = scmp.eq.s32.totalorder %s19, 7
      %p190 = por %p188, %p189
      %p191 = scmp.ne.s32.totalorder %s183, %s186
      %p192 = scmp.eq.s32.totalorder %s19, 0
      %p193 = por %p191, %p192
      %p194 = scmp.ne.s32.totalorder %s183, %s186
      %p195 = scmp.eq.s32.totalorder %s24, 7
      %p196 = por %p194, %p195
      %p197 = scmp.ne.s32.totalorder %s186, %s187
      %p198 = scmp.eq.s32.totalorder %s24, 0
      %p199 = por %p197, %p198
      %p200 = scmp.ne.s32.totalorder %s186, %s187
      %p201 = scmp.eq.s32.totalorder %s25, 7
      %p202 = por %p200, %p201
      %p204 = scmp.ne.s32.totalorder %s187, %s203
      %p205 = scmp.eq.s32.totalorder %s25, 0
      %p206 = por %p204, %p205
      %s207 = ssub.s32 %s26, %s45
      %s208 = ssub.s32 %s27, %s41
      %s209 = sor.u32 %s207, %s208
      %s210 = ssub.s32 %s28, %s37
      %s211 = sor.u32 %s209, %s210
      %p212 = scmp.eq.s32.totalorder %s211, 0
      %s214 = sadd.s32 %s213, 1
      %s215 = scalar_select %p212, %s213, %s214
      %p218 = pneg %p212
      %p219 = scmp.eq.s32.totalorder %s19, 7
      %p220 = por %p218, %p219
      %p221 = scmp.ne.s32.totalorder %s213, %s216
      %p222 = scmp.eq.s32.totalorder %s19, 0
      %p223 = por %p221, %p222
      %p224 = scmp.ne.s32.totalorder %s213, %s216
      %p225 = scmp.eq.s32.totalorder %s24, 7
      %p226 = por %p224, %p225
      %p227 = scmp.ne.s32.totalorder %s216, %s217
      %p228 = scmp.eq.s32.totalorder %s24, 0
      %p229 = por %p227, %p228
      %p230 = scmp.ne.s32.totalorder %s216, %s217
      %p231 = scmp.eq.s32.totalorder %s25, 7
      %p232 = por %p230, %p231
      %p234 = scmp.ne.s32.totalorder %s217, %s233
      %p235 = scmp.eq.s32.totalorder %s25, 0
      %p236 = por %p234, %p235
      %p237 = scmp.le.s32.totalorder 1, %s19
      %p238 = scmp.lt.s32.totalorder %s19, 9
      %p239 = pnand %p237, %p238
      %p240 = pneg %p239
      // Predicated region
      $region9: #{tpu_custom_call.1} parent=5 // pred_check
        _
      $region10: #{tpu_custom_call.1} parent=5 // pred_check_branch
        %242 = sbr.rel (%p239) target = $region12
      $region11: #{tpu_custom_call.1} parent=5 // pred_region
        %s243 = ssub.s32 %s19, 1
        // Predicated region
        $region13: #{tpu_custom_call.1} parent=11 // pred_check
          %p244 = pneg %p118
        $region14: #{tpu_custom_call.1} parent=11 // pred_check_branch
          %246 = sbr.rel (%p244) target = $region16
        $region15: #{tpu_custom_call.1} parent=11 // pred_region
          %p247 = scmp.lt.s32.totalorder %s31, 0
          %s248 = scalar_select %p247, %s31, 0
          %s249 = smul.addr %s248, 8
          %s250 = scalar_lea.vmem %s2, %s249
        $region16: #{tpu_custom_call.1} parent=11 // pred_fallthru
          _
        // Predicated region
        $region17: #{tpu_custom_call.1} parent=11 // pred_check
          %p251 = pneg %p139
        $region18: #{tpu_custom_call.1} parent=11 // pred_check_branch
          %253 = sbr.rel (%p251) target = $region20
        $region19: #{tpu_custom_call.1} parent=11 // pred_region
          _
        $region20: #{tpu_custom_call.1} parent=11 // pred_fallthru
          _
      $region12: #{tpu_custom_call.1} parent=5 // pred_fallthru
        _
      %p254 = scmp.lt.s32.totalorder %s19, 8
      // Predicated region
      $region21: #{tpu_custom_call.1} parent=5 // pred_check
        %p255 = pneg %p254
      $region22: #{tpu_custom_call.1} parent=5 // pred_check_branch
        %257 = sbr.rel (%p255) target = $region24
      $region23: #{tpu_custom_call.1} parent=5 // pred_region
        // Predicated region
        $region25: #{tpu_custom_call.1} parent=23 // pred_check
          %p258 = pneg %p60
        $region26: #{tpu_custom_call.1} parent=23 // pred_check_branch
          %260 = sbr.rel (%p258) target = $region28
        $region27: #{tpu_custom_call.1} parent=23 // pred_region
          %p261 = scmp.lt.s32.totalorder %s26, 1
          %s262 = scalar_select %p261, %s26, 1
          %p263 = scmp.lt.s32.totalorder %s28, 0
          %s264 = scalar_select %p263, %s28, 0
          %s265 = sadd.s32 %s264, %s262
          %s266 = smul.addr %s265, 4
          %s267 = scalar_lea.vmem %s0, %s266
        $region28: #{tpu_custom_call.1} parent=23 // pred_fallthru
          _
        // Predicated region
        $region29: #{tpu_custom_call.1} parent=23 // pred_check
          %p268 = pneg %p86
        $region30: #{tpu_custom_call.1} parent=23 // pred_check_branch
          %270 = sbr.rel (%p268) target = $region32
        $region31: #{tpu_custom_call.1} parent=23 // pred_region
          %p271 = scmp.lt.s32.totalorder %s27, 3
          %s272 = scalar_select %p271, %s27, 3
          %s273 = smul.addr %s272, 4
          %s274 = smul.addr %s273, 4
          %s275 = scalar_lea.vmem %s1, %s274
        $region32: #{tpu_custom_call.1} parent=23 // pred_fallthru
          _
      $region24: #{tpu_custom_call.1} parent=5 // pred_fallthru
        _
      %p276 = scmp.le.s32.totalorder 1, %s19
      %p277 = scmp.lt.s32.totalorder %s19, 9
      %p278 = pnand %p276, %p277
      %p279 = pneg %p278
      // Predicated region
      $region33: #{tpu_custom_call.1} parent=5 // pred_check
        _
      $region34: #{tpu_custom_call.1} parent=5 // pred_check_branch
        %281 = sbr.rel (%p278) target = $region36
      $region35: #{tpu_custom_call.1} parent=5 // pred_region
        %s282 = ssub.s32 %s19, 1
        %p283 = scmp.lt.s32.totalorder %s29, 1
        %s284 = scalar_select %p283, %s29, 1
        %p285 = scmp.lt.s32.totalorder %s31, 0
        %s286 = scalar_select %p285, %s31, 0
        %s287 = sadd.s32 %s286, %s284
        %s288 = smul.addr %s287, 4
        %s289 = scalar_lea.vmem %s0, %s288
        %p290 = pneg %p66
        %p291 = pneg %p63
        %p292 = scmp.lt.s32.totalorder %s30, 3
        %s293 = scalar_select %p292, %s30, 3
        %s294 = smul.addr %s293, 4
        %s295 = smul.addr %s294, 4
        %s296 = scalar_lea.vmem %s1, %s295
        %p297 = pneg %p92
        %p298 = pneg %p89
        %p299 = scmp.lt.s32.totalorder %s31, 0
        %s300 = scalar_select %p299, %s31, 0
        %s301 = smul.addr %s300, 8
        %s302 = scalar_lea.vmem %s2, %s301
        %p303 = pneg %p118
        %p304 = pneg %p115
        %p305 = pneg %p139
        %p306 = pneg %p136
        %p307 = pneg %p169
        %p308 = pneg %p166
        %s309 = sand.u32 %s156, 1
        %s310 = scalar_lea.sflag [#allocation3], %s309
        %s311 = sand.u32 %s156, 1
        %s312 = smul.addr %s311, 4
        %s313 = scalar_lea.vmem [#allocation2], %s312
        %p314 = pneg %p199
        %p315 = pneg %p196
        %s316 = sand.u32 %s24, 1
        %s317 = scalar_lea.sflag [#allocation5], %s316
        %s318 = sand.u32 %s186, 1
        %s319 = smul.addr %s318, 4
        %s320 = scalar_lea.vmem [#allocation4], %s319
        %p321 = pneg %p229
        %p322 = pneg %p226
        %s323 = sand.u32 %s24, 1
        %s324 = scalar_lea.sflag [#allocation5], %s323
        %s325 = sand.u32 %s216, 1
        %s326 = smul.addr %s325, 4
        %s327 = scalar_lea.vmem [#allocation6], %s326
        %p328 = scmp.lt.s32.totalorder %s29, 1
        %s329 = scalar_select %p328, %s29, 1
        %p330 = scmp.lt.s32.totalorder %s31, 0
        %s331 = scalar_select %p330, %s31, 0
        %s332 = sadd.s32 %s331, %s329
        %s333 = smul.addr %s332, 4
        %s334 = scalar_lea.vmem %s0, %s333
        %p335 = scmp.lt.s32.totalorder %s30, 3
        %s336 = scalar_select %p335, %s30, 3
        %s337 = smul.addr %s336, 4
        %s338 = smul.addr %s337, 4
        %s339 = scalar_lea.vmem %s1, %s338
        %p340 = scmp.lt.s32.totalorder %s31, 0
        %s341 = scalar_select %p340, %s31, 0
        %s342 = smul.addr %s341, 8
        %s343 = scalar_lea.vmem %s2, %s342
        %v345 = vld [vmem:[%s334] sm:$0xf]
        %v346 = vld [vmem:[%s339] sm:$0xf]
        %v347 = vld [vmem:[%s339 + $0x4] sm:$0xf]
        %v348 = vld [vmem:[%s339 + $0x8] sm:$0xf]
        %v349 = vld [vmem:[%s339 + $0xc] sm:$0xf]
        %v350 = vld [vmem:[%s3] sm:$0x1]
        %v351 = vld [vmem:[%s343] sm:$0xff]
        %s352 = scalar_lea.vmem %s343, 8
        %v353 = vld [vmem:[%s352] sm:$0xff]
        %v358 = vunpack.c.l.b16 %v346
        %v359 = vunpack.c.l.b16 %v347
        %v360 = vunpack.c.l.b16 %v348
        %v361 = vunpack.c.l.b16 %v349
        %v362 = vpack.c.b16 %v359, %v358
        %v363 = vpack.c.b16 %v361, %v360
        %vm366 = vcmask 261120
        %v368 = vsel %vm366, %v345, 0
        %370 = vmatprep.subr.bf16.mxu0 0
        %371 = vmatpush1.bf16.msra.mxu0 0
        %372 = vmatprep.subr.bf16.mxu0 0
        %373 = vmatpush1.bf16.msra.mxu0 0
        %374 = vmatprep.subr.bf16.mxu0 0
        %375 = vmatpush1.bf16.msra.mxu0 0
        %376 = vmatprep.subr.bf16.mxu0 0
        %377 = vmatpush1.bf16.msra.mxu0 0
        %378 = vmatprep.subr.bf16.mxu0 0
        %379 = vmatpush1.bf16.msra.mxu0 0
        %380 = vmatprep.subr.bf16.mxu0 0
        %381 = vmatpush1.bf16.msra.mxu0 0
        %382 = vmatprep.subr.bf16.mxu0 0
        %383 = vmatpush1.bf16.msra.mxu0 %v363
        %384 = vmatprep.subr.bf16.mxu0 0
        %385 = vmatpush1.bf16.msra.mxu0 %v362
        %386 = vmatprep.subr.bf16.mxu0 0
        %387 = vmatpush2.bf16.msra.mxu0 0
        %388 = vmatprep.subr.bf16.mxu0 0
        %389 = vmatpush2.bf16.msra.mxu0 0
        %390 = vmatprep.subr.bf16.mxu0 0
        %391 = vmatpush2.bf16.msra.mxu0 0
        %392 = vmatprep.subr.bf16.mxu0 0
        %393 = vmatpush2.bf16.msra.mxu0 0
        %394 = vmatprep.subr.bf16.mxu0 0
        %395 = vmatpush2.bf16.msra.mxu0 0
        %396 = vmatprep.subr.bf16.mxu0 0
        %397 = vmatpush2.bf16.msra.mxu0 0
        %398 = vmatprep.subr.bf16.mxu0 0
        %399 = vmatpush2.bf16.msra.mxu0 0
        %400 = vmatprep.subr.bf16.mxu0 0
        %401 = vmatpush2.bf16.msra.mxu0 0
        %402 = vmatprep.mubr.bf16.mxu0 0
        %403 = vmatmul.mubr.bf16.gmra.mxu0 %v368
        %v404 = vpop.f32.mrf.mxu0
        %v405 = vadd.f32 0.0, %v404
        %v406 = vpop.f32.mrf.mxu0
        %v407 = vpop.f32.mrf.mxu0
        %v408 = vpop.f32.mrf.mxu0
        %409 = vdwg.mxu0
        %v410 = vmul.f32 %v405, %v405
        %vm411 = vcmask 64512
        %v412 = vsel %vm411, %v410, 0.0
        %413 = vadd.xlane.f32.xlu0 %v412
        %v414 = vpop.xlane.xlu0 %413
        %v415 = vrcp.pop 8.0
        %v416 = vmul.f32 %v414, %v415
        %v417 = vadd.f32 %v416, 1e-05
        %v418 = vrsqrt.pop %v417
        %v419 = vmul.f32 %v405, %v418
        %v421 = vlaneseq
        %v422 = vshrl.u32 %v421, 7
        %v423 = vsub.s32 0, %v422
        %v424 = vrot.slane %v350, %v423
        %v426 = vmul.f32 %v419, %v424
        %428 = vrot.lane.b32.xlu0 %v426, 124
        %v429 = vpop.permute.xlu0 %428
        %431 = vrot.lane.b32.xlu0 %v426, 4
        %v432 = vpop.permute.xlu0 %431
        %vm434 = vcmask 31744
        %v435 = vsel %vm434, %v429, %v432
        %v436 = vmul.f32 %v426, %v351
        %v437 = vmul.f32 %v435, %v353
        %v438 = vadd.f32 %v436, %v437
        %440 = vrot.lane.b32.xlu0 %v410, 120
        %v441 = vpop.permute.xlu0 %440
        %v443 = vsel %vm411, %v441, 0.0
        %444 = vadd.xlane.f32.xlu0 %v443
        %v445 = vpop.xlane.xlu0 %444
        %v446 = vmul.f32 %v445, %v415
        %v447 = vadd.f32 %v446, 1e-05
        %v448 = vrsqrt.pop %v447
        %v449 = vmul.f32 %v405, %v448
        %450 = vrot.lane.b32.xlu0 %v424, 8
        %v451 = vpop.permute.xlu0 %450
        %v453 = vmul.f32 %v449, %v451
        %455 = vrot.lane.b32.xlu0 %v453, 116
        %v456 = vpop.permute.xlu0 %455
        %458 = vrot.lane.b32.xlu0 %v453, 124
        %v459 = vpop.permute.xlu0 %458
        %v461 = vsel %vm434, %v456, %v459
        %463 = vrot.lane.b32.xlu0 %v351, 8
        %v464 = vpop.permute.xlu0 %463
        %v466 = vmul.f32 %v453, %v464
        %v467 = vmul.f32 %v461, %v353
        %469 = vrot.lane.b32.xlu0 %v467, 8
        %v470 = vpop.permute.xlu0 %469
        %v472 = vadd.f32 %v466, %v470
        %v473 = vpack.c.bf16 %v438, %v438
        %vm474 = vcmask 60416
        %475 = vst.msk [vmem:[%s313] sm:$0xf] %vm474, %v473
        %v476 = vpack.c.bf16 %v472, %v472
        %v478 = vunpack.c.l.b16 %v476
        %v479 = vpack.c.b16 %v478, %v478
        %480 = vrot.lane.b32.xlu0 %v479, 120
        %v481 = vpop.permute.xlu0 %480
        %483 = vst.msk [vmem:[%s320] sm:$0xf] %vm474, %v481
        %v484 = vpack.c.bf16 %v405, %v405
        %v486 = vunpack.c.l.b16 %v484
        %v487 = vpack.c.b16 %v486, %v486
        %488 = vrot.lane.b32.xlu0 %v487, 112
        %v489 = vpop.permute.xlu0 %488
        %491 = vst.msk [vmem:[%s327] sm:$0xf] %vm474, %v489
        %s492 = sand.u32 %s156, 1
        %s493 = scalar_lea.sflag [#allocation3], %s492
        %s494 = sand.u32 %s156, 1
        %s495 = smul.addr %s494, 4
        %s496 = scalar_lea.vmem [#allocation2], %s495
        %s497 = sand.u32 %s24, 1
        %s498 = scalar_lea.sflag [#allocation5], %s497
        %s499 = sand.u32 %s186, 1
        %s500 = smul.addr %s499, 4
        %s501 = scalar_lea.vmem [#allocation4], %s500
        %s502 = sand.u32 %s24, 1
        %s503 = scalar_lea.sflag [#allocation5], %s502
        %s504 = sand.u32 %s216, 1
        %s505 = smul.addr %s504, 4
        %s506 = scalar_lea.vmem [#allocation6], %s505
        // Predicated region
        $region37: #{tpu_custom_call.1} parent=35 // pred_check
          %p507 = pneg %p166
        $region38: #{tpu_custom_call.1} parent=35 // pred_check_branch
          %509 = sbr.rel (%p507) target = $region40
        $region39: #{tpu_custom_call.1} parent=35 // pred_region
          %s511 = ssub.s32 64, 64
          %512 = vsyncadd %s493, %s511
          %s513 = sadd.s32 %s31, %s30
          %s514 = smul.addr %s29, 4
          %s515 = sadd.s32 %s513, %s514
          %s516 = smul.addr %s515, 64
          %s517 = scalar_lea.hbm %s4, %s516
          %s519 = sshll.u32 %s496, 4
          %s520 = int_to_ptr.vmem [resolvable:$true] %s519
          %522 = dma.vmem_to_hbm [thread:$0]  %s520, 64, %s517, %s493
        $region40: #{tpu_custom_call.1} parent=35 // pred_fallthru
          _
        // Predicated region
        $region41: #{tpu_custom_call.1} parent=35 // pred_check
          %p523 = pneg %p196
        $region42: #{tpu_custom_call.1} parent=35 // pred_check_branch
          %525 = sbr.rel (%p523) target = $region44
        $region43: #{tpu_custom_call.1} parent=35 // pred_region
          %s527 = ssub.s32 64, 64
          %528 = vsyncadd %s498, %s527
          %s529 = sadd.s32 %s31, %s30
          %s530 = smul.addr %s29, 4
          %s531 = sadd.s32 %s529, %s530
          %s532 = smul.addr %s531, 64
          %s533 = scalar_lea.hbm %s5, %s532
          %s535 = sshll.u32 %s501, 4
          %s536 = int_to_ptr.vmem [resolvable:$true] %s535
          %538 = dma.vmem_to_hbm [thread:$0]  %s536, 64, %s533, %s498
        $region44: #{tpu_custom_call.1} parent=35 // pred_fallthru
          _
        // Predicated region
        $region45: #{tpu_custom_call.1} parent=35 // pred_check
          %p539 = pneg %p226
        $region46: #{tpu_custom_call.1} parent=35 // pred_check_branch
          %541 = sbr.rel (%p539) target = $region48
        $region47: #{tpu_custom_call.1} parent=35 // pred_region
          %s543 = ssub.s32 64, 64
          %544 = vsyncadd %s503, %s543
          %s545 = sadd.s32 %s31, %s30
          %s546 = smul.addr %s29, 4
          %s547 = sadd.s32 %s545, %s546
          %s548 = smul.addr %s547, 64
          %s549 = scalar_lea.hbm %s6, %s548
          %s551 = sshll.u32 %s506, 4
          %s552 = int_to_ptr.vmem [resolvable:$true] %s551
          %554 = dma.vmem_to_hbm [thread:$0]  %s552, 64, %s549, %s503
        $region48: #{tpu_custom_call.1} parent=35 // pred_fallthru
          _
      $region36: #{tpu_custom_call.1} parent=5 // pred_fallthru
        _
      %p555 = scmp.le.s32.totalorder 2, %s19
      // Predicated region
      $region49: #{tpu_custom_call.1} parent=5 // pred_check
        %p556 = pneg %p555
      $region50: #{tpu_custom_call.1} parent=5 // pred_check_branch
        %558 = sbr.rel (%p556) target = $region52
      $region51: #{tpu_custom_call.1} parent=5 // pred_region
        %s559 = ssub.s32 %s19, 2
        // Predicated region
        $region53: #{tpu_custom_call.1} parent=51 // pred_check
          %p560 = pneg %p172
        $region54: #{tpu_custom_call.1} parent=51 // pred_check_branch
          %562 = sbr.rel (%p560) target = $region56
        $region55: #{tpu_custom_call.1} parent=51 // pred_region
          %s563 = sand.u32 %s157, 1
          %s564 = scalar_lea.sflag [#allocation3], %s563
          %s565 = sand.u32 %s157, 1
          %s566 = smul.addr %s565, 4
          %s567 = scalar_lea.vmem [#allocation2], %s566
          %568 = dma.done %s564, 64
        $region56: #{tpu_custom_call.1} parent=51 // pred_fallthru
          _
        // Predicated region
        $region57: #{tpu_custom_call.1} parent=51 // pred_check
          %p569 = pneg %p202
        $region58: #{tpu_custom_call.1} parent=51 // pred_check_branch
          %571 = sbr.rel (%p569) target = $region60
        $region59: #{tpu_custom_call.1} parent=51 // pred_region
          %s572 = sand.u32 %s25, 1
          %s573 = scalar_lea.sflag [#allocation5], %s572
          %s574 = sand.u32 %s187, 1
          %s575 = smul.addr %s574, 4
          %s576 = scalar_lea.vmem [#allocation4], %s575
          %577 = dma.done %s573, 64
        $region60: #{tpu_custom_call.1} parent=51 // pred_fallthru
          _
        // Predicated region
        $region61: #{tpu_custom_call.1} parent=51 // pred_check
          %p578 = pneg %p232
        $region62: #{tpu_custom_call.1} parent=51 // pred_check_branch
          %580 = sbr.rel (%p578) target = $region64
        $region63: #{tpu_custom_call.1} parent=51 // pred_region
          %s581 = sand.u32 %s25, 1
          %s582 = scalar_lea.sflag [#allocation5], %s581
          %s583 = sand.u32 %s217, 1
          %s584 = smul.addr %s583, 4
          %s585 = scalar_lea.vmem [#allocation6], %s584
          %586 = dma.done %s582, 64
        $region64: #{tpu_custom_call.1} parent=51 // pred_fallthru
          _
      $region52: #{tpu_custom_call.1} parent=5 // pred_fallthru
        _
    $region6: #{tpu_custom_call.1} parent=1 // loop_footer
      %s23 = sadd.s32 1, %s19
    $region7: #{tpu_custom_call.1} parent=1 // loop_footer_branch
      %18 = sbr.rel target = $region3
    $region8: #{tpu_custom_call.1} parent=1 // loop_exit
      _
    %587 = vsyncpa [#allocation3], 1
    %s588 = scalar_lea.sflag [#allocation3], 1
    %589 = vsyncpa %s588, 1
    %590 = vsyncpa [#allocation5], 1
    %s591 = scalar_lea.sflag [#allocation5], 1
    %592 = vsyncpa %s591, 1

</llo_original>
